<compile_context>
chip_gen: v7x
topology: tpu7x:2x2x1
jax: 0.10.0
libtpu: 0.0.40
codegen_flags: <defaults>
</compile_context>

<pallas_src>
import jax
import jax.numpy as jnp
from jax.experimental import pallas as pl
from jax.experimental.pallas import tpu as pltpu


_FULL_GRID_BLOCK_BYTES = 4 * 1024 * 1024   # X, Y, out all pipelined
_OUTPUT_ONLY_BLOCK_BYTES = 8 * 1024 * 1024  # only the output is a big buffer
_VMEM_LIMIT_BYTES = 32 * 1024 * 1024
_MIN_SPLIT_BYTES = 1 * 1024 * 1024          # arrays >= this get >= 2 row blocks


# --------------------------------------------------------------------------
# Kernels
# --------------------------------------------------------------------------

def gaussian2d_kernel(val_ref, x_ref, y_ref, o_ref):
    # val_ref: SMEM, shape (3,) -> [amp, waist, bias]
    amp = val_ref[0]
    waist = val_ref[1]
    bias = val_ref[2]
    # One exact scalar divide per grid step instead of per-element work.
    neg_inv_w2 = -1.0 / (waist * waist)

    x = x_ref[...].astype(jnp.float32)
    y = y_ref[...].astype(jnp.float32)
    # X0 = Y0 = 0, as in the PyTorch module.
    z = bias + amp * jnp.exp((x * x + y * y) * neg_inv_w2)
    o_ref[...] = z.astype(o_ref.dtype)


def gaussian2d_meshgrid_kernel(val_ref, x_ref, y_ref, o_ref):
    # x_ref: (1, W)  -> column (lane) coordinates, resident
    # y_ref: (tr, 1) -> row (sublane) coordinate slice
    amp = val_ref[0]
    waist = val_ref[1]
    bias = val_ref[2]
    neg_inv_w2 = -1.0 / (waist * waist)

    xr = x_ref[...]          # (1, W)
    yc = y_ref[...]          # (tr, 1)
    r2 = xr * xr + yc * yc   # broadcasts to (tr, W)
    o_ref[...] = (bias + amp * jnp.exp(r2 * neg_inv_w2)).astype(o_ref.dtype)


def gaussian2d_affine_kernel(val_ref, coord_ref, o_ref):
    # coord_ref: SMEM, shape (4,) -> [x0, dx, y0, dy]; coordinates are built
    # in-kernel, so this path has essentially zero input HBM traffic.
    amp = val_ref[0]
    waist = val_ref[1]
    bias = val_ref[2]
    x0 = coord_ref[0]
    dx = coord_ref[1]
    y0 = coord_ref[2]
    dy = coord_ref[3]
    neg_inv_w2 = -1.0 / (waist * waist)

    tr, w = o_ref.shape
    row_base = pl.program_id(0) * tr
    row = jax.lax.broadcasted_iota(jnp.int32, (tr, w), 0) + row_base
    col = jax.lax.broadcasted_iota(jnp.int32, (tr, w), 1)
    x = x0 + col.astype(jnp.float32) * dx
    y = y0 + row.astype(jnp.float32) * dy
    o_ref[...] = (bias + amp * jnp.exp((x * x + y * y) * neg_inv_w2)).astype(
        o_ref.dtype)


# --------------------------------------------------------------------------
# Tiling helpers
# --------------------------------------------------------------------------

def _sublane_multiple(dtype):
    """Sublane packing multiple: 8 for 4-byte, 16 for bf16, 32 for int8."""
    itemsize = jnp.dtype(dtype).itemsize
    return max(8, 32 // itemsize)


def _choose_tile_rows(H, W, dtype, max_block_bytes):
    """Row tile: sublane-aligned, capped by the block budget, never ragged-averse.

    The grid uses pl.cdiv, so tr need NOT divide H (Pallas masks the last
    block).  Arrays >= _MIN_SPLIT_BYTES are forced onto >= 2 row blocks so
    both v7x TensorCores receive work on the "parallel" grid axis.
    """
    sub = _sublane_multiple(dtype)
    itemsize = jnp.dtype(dtype).itemsize
    row_bytes = max(1, W * itemsize)
    total_bytes = H * row_bytes

    if H <= sub:
        # Cannot tile rows below one sublane tile: block row dim = full H.
        return H

    # Largest sublane-aligned row count within the per-block budget.
    # TODO(synk): for single rows wider than max_block_bytes a 2-D (row, col)
    # grid would be needed; not required for Gaussian-fit shapes.
    max_rows = max(sub, (max_block_bytes // row_bytes) // sub * sub)

    min_blocks = 2 if total_bytes >= _MIN_SPLIT_BYTES else 1
    rows_per_block = (H + min_blocks - 1) // min_blocks
    rows_per_block = ((rows_per_block + sub - 1) // sub) * sub

    tr = min(max_rows, rows_per_block)
    if tr >= H:
        return H
    return tr


def _scalar_spec():
    return pl.BlockSpec(memory_space=pltpu.MemorySpace.SMEM)


def _compiler_params():
    return pltpu.CompilerParams(
        dimension_semantics=("parallel",),
        vmem_limit_bytes=_VMEM_LIMIT_BYTES,
    )


# --------------------------------------------------------------------------
# Wrappers
# --------------------------------------------------------------------------

def _full_grid_call(val, X, Y, max_block_bytes):
    H, W = X.shape
    tr = _choose_tile_rows(H, W, X.dtype, max_block_bytes)
    grid = (pl.cdiv(H, tr),)
    return pl.pallas_call(
        gaussian2d_kernel,
        out_shape=jax.ShapeDtypeStruct((H, W), X.dtype),
        grid=grid,
        in_specs=[
            _scalar_spec(),                               # [amp, waist, bias]
            pl.BlockSpec((tr, W), lambda i: (i, 0)),
            pl.BlockSpec((tr, W), lambda i: (i, 0)),
        ],
        out_specs=pl.BlockSpec((tr, W), lambda i: (i, 0)),
        compiler_params=_compiler_params(),
    )(val, X, Y)


def net_forward(val, X, Y, *, max_block_bytes=_FULL_GRID_BLOCK_BYTES):
    """Pallas equivalent of Net.forward(X, Y) for full (H, W) coordinate grids."""
    assert X.shape == Y.shape and X.dtype == Y.dtype
    H, W = X.shape
    # Lane-dense repack: if W is not a multiple of 128 but the flat problem
    # can be viewed with a 128-multiple last dim, reshape (free for an
    # elementwise kernel) so stores are unmasked vst instead of vst.msk.
    if W % 128 != 0:
        total = H * W
        for lanes in (1024, 512, 256, 128):
            if total % lanes == 0:
                out = _full_grid_call(
                    val,
                    X.reshape(total // lanes, lanes),
                    Y.reshape(total // lanes, lanes),
                    max_block_bytes,
                )
                return out.reshape(H, W)
    return _full_grid_call(val, X, Y, max_block_bytes)


def net_forward_meshgrid(val, x, y, *, out_dtype=None,
                         max_block_bytes=_OUTPUT_ONLY_BLOCK_BYTES):
    """Meshgrid fast path: 1-D coordinates instead of full (H, W) grids.

    out[i, j] = bias + amp * exp(-(x[j]^2 + y[i]^2) / waist^2)
    i.e. identical to net_forward(val, X, Y) with X, Y = jnp.meshgrid(x, y).
    """
    (W,) = x.shape
    (H,) = y.shape
    if out_dtype is None:
        out_dtype = jnp.result_type(x.dtype, y.dtype)
    x2 = x.reshape(1, W).astype(jnp.float32)
    y2 = y.reshape(H, 1).astype(jnp.float32)
    tr = _choose_tile_rows(H, W, out_dtype, max_block_bytes)
    grid = (pl.cdiv(H, tr),)
    return pl.pallas_call(
        gaussian2d_meshgrid_kernel,
        out_shape=jax.ShapeDtypeStruct((H, W), out_dtype),
        grid=grid,
        in_specs=[
            _scalar_spec(),
            pl.BlockSpec((1, W), lambda i: (0, 0)),    # x row, resident
            pl.BlockSpec((tr, 1), lambda i: (i, 0)),   # y column slice
        ],
        out_specs=pl.BlockSpec((tr, W), lambda i: (i, 0)),
        compiler_params=_compiler_params(),
    )(val, x2, y2)


def net_forward_affine(val, x0, dx, y0, dy, H, W, *, out_dtype=jnp.float32,
                       max_block_bytes=_OUTPUT_ONLY_BLOCK_BYTES):
    """Zero-input-HBM path: X[i,j] = x0 + j*dx, Y[i,j] = y0 + i*dy in-kernel."""
    coords = jnp.array([x0, dx, y0, dy], dtype=jnp.float32)
    tr = _choose_tile_rows(H, W, out_dtype, max_block_bytes)
    grid = (pl.cdiv(H, tr),)
    return pl.pallas_call(
        gaussian2d_affine_kernel,
        out_shape=jax.ShapeDtypeStruct((H, W), out_dtype),
        grid=grid,
        in_specs=[_scalar_spec(), _scalar_spec()],
        out_specs=pl.BlockSpec((tr, W), lambda i: (i, 0)),
        compiler_params=_compiler_params(),
    )(val, coords)


# --------------------------------------------------------------------------
# Demo / correctness checks
# --------------------------------------------------------------------------

if __name__ == "__main__":
    key = jax.random.PRNGKey(0)
    kx, ky = jax.random.split(key)

    # val = [amplitude, waist, bias], same role as torch.nn.Parameter(val_in).
    # TODO(synk): the training loop / autograd on `val` is outside the forward
    # pass and is not part of this kernel.
    val = jnp.array([2.0, 1.5, 0.5], dtype=jnp.float32)

    def reference(val, X, Y):
        amp, waist, bias = val[0], val[1], val[2]
        return bias + amp * jnp.exp((-(X - 0.0) ** 2 - (Y - 0.0) ** 2) / waist ** 2)

    # 1) Tiny demo shape -> single lane-dense block.
    H, W = 16, 128
    X = jax.random.normal(kx, (H, W), dtype=jnp.float32) * 2.0
    Y = jax.random.normal(ky, (H, W), dtype=jnp.float32) * 2.0
    z = net_forward(val, X, Y)
    jax.block_until_ready(z)
    assert z.shape == (H, W) and z.dtype == X.dtype
    assert jnp.allclose(z, reference(val, X, Y), atol=1e-5, rtol=1e-5)

    # 2) Ragged rows (H not a multiple of the tile) with a forced-small block:
    #    exercises the cdiv grid + masked last block.
    H2, W2 = 100, 128
    X2 = jax.random.normal(kx, (H2, W2), dtype=jnp.float32)
    Y2 = jax.random.normal(ky, (H2, W2), dtype=jnp.float32)
    z2 = net_forward(val, X2, Y2, max_block_bytes=16 * 1024)
    jax.block_until_ready(z2)
    assert jnp.allclose(z2, reference(val, X2, Y2), atol=1e-5, rtol=1e-5)

    # 3) Non-128-multiple W -> lane-dense repack path ((16, 96) -> (3, 512)).
    H3, W3 = 16, 96
    X3 = jax.random.normal(kx, (H3, W3), dtype=jnp.float32)
    Y3 = jax.random.normal(ky, (H3, W3), dtype=jnp.float32)
    z3 = net_forward(val, X3, Y3)
    jax.block_until_ready(z3)
    assert z3.shape == (H3, W3)
    assert jnp.allclose(z3, reference(val, X3, Y3), atol=1e-5, rtol=1e-5)

    # 4) bf16 inputs with forced tiling: dtype-aware sublane multiple (16).
    H4, W4 = 64, 128
    X4 = jax.random.normal(kx, (H4, W4), dtype=jnp.float32).astype(jnp.bfloat16)
    Y4 = jax.random.normal(ky, (H4, W4), dtype=jnp.float32).astype(jnp.bfloat16)
    z4 = net_forward(val, X4, Y4, max_block_bytes=8 * 1024)
    jax.block_until_ready(z4)
    assert z4.dtype == jnp.bfloat16
    ref4 = reference(val, X4.astype(jnp.float32), Y4.astype(jnp.float32))
    assert jnp.allclose(z4.astype(jnp.float32), ref4, atol=3e-2, rtol=3e-2)

    # 5) Mid-sized array (>= 1 MiB) -> forced >= 2 row blocks (grid of 2).
    H5, W5 = 2048, 256
    X5 = jax.random.normal(kx, (H5, W5), dtype=jnp.float32)
    Y5 = jax.random.normal(ky, (H5, W5), dtype=jnp.float32)
    z5 = net_forward(val, X5, Y5)
    jax.block_until_ready(z5)
    assert jnp.allclose(z5, reference(val, X5, Y5), atol=1e-5, rtol=1e-5)

    # 6) Meshgrid fast path: 1-D coordinates, in-kernel broadcast.
    H6, W6 = 256, 512
    xs = jnp.linspace(-3.0, 3.0, W6, dtype=jnp.float32)
    ys = jnp.linspace(-2.0, 2.0, H6, dtype=jnp.float32)
    Xg, Yg = jnp.meshgrid(xs, ys)
    zg = net_forward_meshgrid(val, xs, ys)
    jax.block_until_ready(zg)
    assert zg.shape == (H6, W6) and zg.dtype == jnp.float32
    assert jnp.allclose(zg, reference(val, Xg, Yg), atol=1e-5, rtol=1e-5)

    # 7) Affine/iota path: coordinates synthesized in-kernel (no input HBM).
    x0, dx = float(xs[0]), float(xs[1] - xs[0])
    y0, dy = float(ys[0]), float(ys[1] - ys[0])
    za = net_forward_affine(val, x0, dx, y0, dy, H6, W6)
    jax.block_until_ready(za)
    ja = jnp.arange(W6, dtype=jnp.float32)
    ia = jnp.arange(H6, dtype=jnp.float32)
    Xa = x0 + ja[None, :] * dx
    Ya = y0 + ia[:, None] * dy
    assert jnp.allclose(za, reference(val, Xa, Ya), atol=1e-5, rtol=1e-5)

    print("KERNEL_OK")
</pallas_src>

<mosaic_0001>
module attributes {stable_mosaic.version = 11 : i64} {
  func.func @gaussian2d_kernel(%arg0: i32, %arg1: memref<3xf32, #tpu.memory_space<smem>>, %arg2: memref<16x128xf32, #tpu.memory_space<vmem>>, %arg3: memref<16x128xf32, #tpu.memory_space<vmem>>, %arg4: memref<16x128xf32, #tpu.memory_space<vmem>>) attributes {dimension_semantics = [#tpu.dimension_semantics<parallel>], iteration_bounds = array<i64: 1>, scalar_prefetch = 0 : i64, scratch_operands = 0 : i64, tpu.core_type = #tpu.core_type<tc>, window_params = [{transform_indices = @transform_0, window_bounds = array<i64: 3>}, {transform_indices = @transform_1, window_bounds = array<i64: 16, 128>}, {transform_indices = @transform_2, window_bounds = array<i64: 16, 128>}, {transform_indices = @transform_3, window_bounds = array<i64: 16, 128>}]} {
    %c0 = arith.constant 0 : index
    %0 = memref.load %arg1[%c0] : memref<3xf32, #tpu.memory_space<smem>>
    %c1 = arith.constant 1 : index
    %1 = memref.load %arg1[%c1] : memref<3xf32, #tpu.memory_space<smem>>
    %c2 = arith.constant 2 : index
    %2 = memref.load %arg1[%c2] : memref<3xf32, #tpu.memory_space<smem>>
    %3 = arith.mulf %1, %1 : f32
    %cst = arith.constant -1.000000e+00 : f32
    %4 = arith.divf %cst, %3 : f32
    %c0_0 = arith.constant 0 : index
    %c0_1 = arith.constant 0 : index
    %5 = vector.load %arg2[%c0_0, %c0_1] : memref<16x128xf32, #tpu.memory_space<vmem>>, vector<16x128xf32>
    %c0_2 = arith.constant 0 : index
    %c0_3 = arith.constant 0 : index
    %6 = vector.load %arg3[%c0_2, %c0_3] : memref<16x128xf32, #tpu.memory_space<vmem>>, vector<16x128xf32>
    %7 = arith.mulf %5, %5 : vector<16x128xf32>
    %8 = arith.mulf %6, %6 : vector<16x128xf32>
    %9 = arith.addf %7, %8 : vector<16x128xf32>
    %10 = vector.broadcast %4 : f32 to vector<16x128xf32>
    %11 = arith.mulf %9, %10 : vector<16x128xf32>
    %12 = math.exp %11 : vector<16x128xf32>
    %13 = vector.broadcast %0 : f32 to vector<16x128xf32>
    %14 = arith.mulf %13, %12 : vector<16x128xf32>
    %15 = vector.broadcast %2 : f32 to vector<16x128xf32>
    %16 = arith.addf %15, %14 : vector<16x128xf32>
    %c0_4 = arith.constant 0 : index
    %c0_5 = arith.constant 0 : index
    %17 = vector.load %arg4[%c0_4, %c0_5] : memref<16x128xf32, #tpu.memory_space<vmem>>, vector<16x128xf32>
    tpu.vector_store %arg4[%c0_4, %c0_5], %16 {strides = array<i32>} : memref<16x128xf32, #tpu.memory_space<vmem>>, vector<16x128xf32>,
    return
  }
  func.func @transform_0(%arg0: i32) -> i32 {
    %c0_i32 = arith.constant 0 : i32
    %c0_i32_0 = arith.constant 0 : i32
    return %c0_i32 : i32
  }
  func.func @transform_1(%arg0: i32) -> (i32, i32) {
    %c0_i32 = arith.constant 0 : i32
    %c0_i32_0 = arith.constant 0 : i32
    return %arg0, %c0_i32 : i32, i32
  }
  func.func @transform_2(%arg0: i32) -> (i32, i32) {
    %c0_i32 = arith.constant 0 : i32
    %c0_i32_0 = arith.constant 0 : i32
    return %arg0, %c0_i32 : i32, i32
  }
  func.func @transform_3(%arg0: i32) -> (i32, i32) {
    %c0_i32 = arith.constant 0 : i32
    %c0_i32_0 = arith.constant 0 : i32
    return %arg0, %c0_i32 : i32, i32
  }
}

</mosaic_0001>

<llo_original>
// kernel: tpu_custom_call.1
$region0: #{tpu_custom_call.1}
  #allocation0 [shape = 'u32[]', space=smem, size = 0x4, offset = 0x4, fixed_abs, tag = 'smem constant byte address 0x4 - core index']
  #allocation1 [shape = 'u32[144,128]{1,0:T(1,128)}', space=vmem, size = 0x12000, scoped, tag = 'internal scratch']
  %s0 = inlined_call_operand.hbm [shape: f32[3], index: 0, kind: input, shape index: {}]
  %s1 = inlined_call_operand.hbm [shape: f32[16,128], index: 1, kind: input, shape index: {}]
  %s2 = inlined_call_operand.hbm [shape: f32[16,128], index: 2, kind: input, shape index: {}]
  %s3 = inlined_call_operand.hbm [shape: f32[16,128], index: 3, kind: output, shape index: {}]
  %s4 = sld [smem:[#allocation0]]
  $region34: #{tpu_custom_call.1} parent=0
    _
  %s6 = ssub.s32 1, %s4
  %s7 = scalar_select 0, %s6, %s4
  $region1: #{tpu_custom_call.1} parent=0
    #allocation2 [shape = 'u8[512]{0}', space=smem, size = 0x200, scoped, tag = 'input window, operand 0, single buffered']
    #allocation3 [shape = 's32[1]{0}', space=sflag, size = 0x4, scoped, tag = 'scoped memory for tpu_custom_call.1']
    #allocation4 [shape = 's32[1]{0}', space=sflag, size = 0x4, scoped, tag = 'scoped memory for tpu_custom_call.1']
    #allocation5 [shape = 's32[1]{0}', space=sflag, size = 0x4, scoped, tag = 'scoped memory for tpu_custom_call.1']
    #allocation6 [shape = 'u8[8192]{0}', space=vmem, size = 0x2000, scoped, tag = 'input window, operand 1, single buffered']
    #allocation7 [shape = 'u8[8192]{0}', space=vmem, size = 0x2000, scoped, tag = 'input window, operand 2, single buffered']
    #allocation8 [shape = 's32[1]{0}', space=sflag, size = 0x4, scoped, tag = 'scoped memory for tpu_custom_call.1']
    #allocation9 [shape = 'u8[8192]{0}', space=vmem, size = 0x2000, scoped, tag = 'output window, operand 0, single buffered']
    %8 = vsyncpa [#allocation5], 0
    %9 = vsyncpa [#allocation3], 0
    %10 = vsyncpa [#allocation8], 0
    %11 = vsyncpa [#allocation4], 0
    // Predicated region
    $region2: #{tpu_custom_call.1} parent=1 // pred_check
      _
    $region3: #{tpu_custom_call.1} parent=1 // pred_check_branch
      %13 = sbr.rel (0) target = $region5
    $region4: #{tpu_custom_call.1} parent=1 // pred_region
      %s15 = ssub.s32 16, 16
      %16 = vsyncadd [#allocation5], %s15
      %19 = dma.hbm_to_smem %s0, 16, [#allocation2], [#allocation5]
    $region5: #{tpu_custom_call.1} parent=1 // pred_fallthru
      _
    // Predicated region
    $region6: #{tpu_custom_call.1} parent=1 // pred_check
      _
    $region7: #{tpu_custom_call.1} parent=1 // pred_check_branch
      %21 = sbr.rel (0) target = $region9
    $region8: #{tpu_custom_call.1} parent=1 // pred_region
      %s23 = ssub.s32 256, 256
      %24 = vsyncadd [#allocation3], %s23
      %s25 = sshll.u32 [#allocation6], 4
      %s26 = int_to_ptr.vmem [resolvable:$true] %s25
      %31 = dma.hbm_to_vmem [thread:$0]  %s1, 256, %s26, [#allocation3], 128, 128, 8
    $region9: #{tpu_custom_call.1} parent=1 // pred_fallthru
      _
    // Predicated region
    $region10: #{tpu_custom_call.1} parent=1 // pred_check
      _
    $region11: #{tpu_custom_call.1} parent=1 // pred_check_branch
      %33 = sbr.rel (0) target = $region13
    $region12: #{tpu_custom_call.1} parent=1 // pred_region
      %s35 = ssub.s32 256, 256
      %36 = vsyncadd [#allocation8], %s35
      %s37 = sshll.u32 [#allocation7], 4
      %s38 = int_to_ptr.vmem [resolvable:$true] %s37
      %43 = dma.hbm_to_vmem [thread:$0]  %s2, 256, %s38, [#allocation8], 128, 128, 8
    $region13: #{tpu_custom_call.1} parent=1 // pred_fallthru
      _
    // Predicated region
    $region14: #{tpu_custom_call.1} parent=1 // pred_check
      _
    $region15: #{tpu_custom_call.1} parent=1 // pred_check_branch
      %45 = sbr.rel (0) target = $region17
    $region16: #{tpu_custom_call.1} parent=1 // pred_region
      %46 = dma.done [#allocation5], 16
    $region17: #{tpu_custom_call.1} parent=1 // pred_fallthru
      _
    // Predicated region
    $region18: #{tpu_custom_call.1} parent=1 // pred_check
      _
    $region19: #{tpu_custom_call.1} parent=1 // pred_check_branch
      %48 = sbr.rel (0) target = $region21
    $region20: #{tpu_custom_call.1} parent=1 // pred_region
      %49 = dma.done [#allocation3], 256
    $region21: #{tpu_custom_call.1} parent=1 // pred_fallthru
      _
    // Predicated region
    $region22: #{tpu_custom_call.1} parent=1 // pred_check
      _
    $region23: #{tpu_custom_call.1} parent=1 // pred_check_branch
      %51 = sbr.rel (0) target = $region25
    $region24: #{tpu_custom_call.1} parent=1 // pred_region
      %52 = dma.done [#allocation8], 256
    $region25: #{tpu_custom_call.1} parent=1 // pred_fallthru
      _
    %53 = sfence
    %s54 = sld [smem:[#allocation2]]
    %s55 = sld [smem:[#allocation2 + $0x1]]
    %s56 = sld [smem:[#allocation2 + $0x2]]
    %s57 = smul.f32 %s55, %s55
    %v58 = vstv %s57
    %v59 = vrcp.pop %v58
    %s60 = vtos %v59
    %s61 = smul.f32 -1.0, %s60
    %v62 = vld [vmem:[#allocation6] sm:$0xff]
    %v63 = vld [vmem:[#allocation6 + $0x8] sm:$0xff]
    %v64 = vld [vmem:[#allocation7] sm:$0xff]
    %v65 = vld [vmem:[#allocation7 + $0x8] sm:$0xff]
    %v66 = vmul.f32 %v62, %v62
    %v67 = vmul.f32 %v63, %v63
    %v68 = vmul.f32 %v64, %v64
    %v69 = vmul.f32 %v65, %v65
    %v70 = vadd.f32 %v66, %v68
    %v71 = vadd.f32 %v67, %v69
    %v72 = vstv %s61
    %v73 = vmul.f32 %v70, %v72
    %v74 = vmul.f32 %v71, %v72
    %v75 = vmul.f32 %v73, 1.442695
    %v76 = vpow.pop %v75
    %v77 = vmul.f32 %v74, 1.442695
    %v78 = vpow.pop %v77
    %v79 = vstv %s54
    %v80 = vmul.f32 %v79, %v76
    %v81 = vmul.f32 %v79, %v78
    %v82 = vstv %s56
    %v83 = vadd.f32 %v82, %v80
    %v84 = vadd.f32 %v82, %v81
    %85 = vst [vmem:[#allocation9] sm:$0xff] %v83
    %86 = vst [vmem:[#allocation9 + $0x8] sm:$0xff] %v84
    // Predicated region
    $region26: #{tpu_custom_call.1} parent=1 // pred_check
      _
    $region27: #{tpu_custom_call.1} parent=1 // pred_check_branch
      %88 = sbr.rel (0) target = $region29
    $region28: #{tpu_custom_call.1} parent=1 // pred_region
      %s90 = ssub.s32 256, 256
      %91 = vsyncadd [#allocation4], %s90
      %s92 = sshll.u32 [#allocation9], 4
      %s93 = int_to_ptr.vmem [resolvable:$true] %s92
      %98 = dma.vmem_to_hbm [thread:$0]  %s93, 256, %s3, [#allocation4], 128, 128, 8
    $region29: #{tpu_custom_call.1} parent=1 // pred_fallthru
      _
    // Predicated region
    $region30: #{tpu_custom_call.1} parent=1 // pred_check
      _
    $region31: #{tpu_custom_call.1} parent=1 // pred_check_branch
      %100 = sbr.rel (0) target = $region33
    $region32: #{tpu_custom_call.1} parent=1 // pred_region
      %101 = dma.done [#allocation4], 256
    $region33: #{tpu_custom_call.1} parent=1 // pred_fallthru
      _
    %102 = vsyncpa [#allocation3], 1
    %103 = vsyncpa [#allocation8], 1
    %104 = vsyncpa [#allocation4], 1
    %105 = vsyncpa [#allocation5], 1

</llo_original>
